<compile_context>
chip_gen: v5e
topology: v5e:2x2
jax: 0.10.0
libtpu: 0.0.40
codegen_flags: <defaults>
</compile_context>

<pallas_src>
import math

import jax
import jax.numpy as jnp
from jax.experimental import pallas as pl
from jax.experimental.pallas import tpu as pltpu

_LANE = 128          # TPU lane width (minor vreg dim)
_SUBLANE_PACK = 32   # sublane multiple safe for int8/int16/int32/f32/bf16 tilings


def _round_up(x: int, m: int) -> int:
    return ((x + m - 1) // m) * m


def _make_kernel(num_bits: int):
    def kernel(x_ref, o_ref):
        # x_ref: (rows, 128) int{8,16,32}; o_ref: (num_bits, rows, 128) out dtype.
        xv = x_ref[...].astype(jnp.int32)
        for b in range(num_bits):                     # static unroll, constant shifts
            # bit-major plane b: pure VPU (shift, and, convert) + full-vreg stores
            o_ref[b, :, :] = ((xv >> b) & 1).astype(o_ref.dtype)
    return kernel


def binary_encode(x, num_bits: int, dtype=jnp.float32, *, bit_major: bool = False,
                  target_out_block_bytes: int = 4 * 1024 * 1024):
    """Pallas TPU implementation of BinaryEncode.forward.

    Default returns x.shape + (num_bits,) (torch layout). With bit_major=True it
    returns (num_bits,) + x.shape and skips the wrapper-side transpose.
    """
    if not (1 <= num_bits <= 32):
        raise ValueError("num_bits must be in [1, 32] for 32-bit integer inputs")
    # TODO(synk): num_bits > 32 (int64 torch inputs) would need a two-word path.

    orig_shape = tuple(x.shape)
    m = math.prod(orig_shape)
    if m == 0:
        shape = ((num_bits,) + orig_shape) if bit_major else (orig_shape + (num_bits,))
        return jnp.zeros(shape, dtype=dtype)

    # Keep narrow signed ints at native width (less input DMA); widen in-kernel.
    # Everything else goes to int32 (bit pattern preserved mod 2**32, matching
    # torch's behaviour for bits 0..31).
    if x.dtype.name not in ("int8", "int16", "int32"):
        x = x.astype(jnp.int32)

    in_itemsize = jnp.dtype(x.dtype).itemsize
    out_itemsize = jnp.dtype(dtype).itemsize

    # ---- tiling: flatten to (rows, 128); block = (rows_tile, 128) ----------
    rows_needed = -(-m // _LANE)
    rows_target = target_out_block_bytes // (_LANE * num_bits * out_itemsize)
    rows_target = max(_SUBLANE_PACK, (rows_target // _SUBLANE_PACK) * _SUBLANE_PACK)
    rows_tile = min(rows_target, _round_up(rows_needed, _SUBLANE_PACK))
    total_rows = _round_up(rows_needed, rows_tile)
    m_pad = total_rows * _LANE
    grid = (total_rows // rows_tile,)

    x_flat = x.reshape(-1)
    if m_pad != m:
        x_flat = jnp.pad(x_flat, (0, m_pad - m))
    x2d = x_flat.reshape(total_rows, _LANE)

    in_block_bytes = rows_tile * _LANE * in_itemsize
    out_block_bytes = num_bits * rows_tile * _LANE * out_itemsize
    vmem_limit = min(max(2 * (in_block_bytes + out_block_bytes) + (2 << 20), 8 << 20),
                     48 << 20)

    out_bitmajor = pl.pallas_call(
        _make_kernel(num_bits),
        out_shape=jax.ShapeDtypeStruct((num_bits, total_rows, _LANE), dtype),
        grid=grid,
        in_specs=[pl.BlockSpec((rows_tile, _LANE), lambda i: (i, 0))],
        out_specs=pl.BlockSpec((num_bits, rows_tile, _LANE), lambda i: (0, i, 0)),
        compiler_params=pltpu.CompilerParams(
            dimension_semantics=("parallel",),       # multi-TC chips split the grid
            vmem_limit_bytes=int(vmem_limit),
        ),
        cost_estimate=pl.CostEstimate(
            flops=2 * num_bits * m_pad,
            transcendentals=0,
            bytes_accessed=m_pad * in_itemsize + num_bits * m_pad * out_itemsize,
        ),
    )(x2d)

    if bit_major:
        return out_bitmajor.reshape(num_bits, m_pad)[:, :m].reshape((num_bits,) + orig_shape)

    # Torch layout: one 2-D transpose outside the kernel (layout plumbing only).
    out = jnp.transpose(out_bitmajor.reshape(num_bits, m_pad))[:m]
    return out.reshape(orig_shape + (num_bits,))


def binary_encode_ref(x, num_bits: int, dtype=jnp.float32):
    """Pure-JAX reference mirroring the PyTorch forward (robust shift form)."""
    arange = jnp.arange(num_bits, dtype=jnp.int32)
    return ((x.astype(jnp.int32)[..., None] >> arange) & 1).astype(dtype)


if __name__ == "__main__":
    key = jax.random.PRNGKey(0)
    k1, k2 = jax.random.split(key)

    # Case 1: typical use — small non-negative ids, num_bits=8, float32 output.
    num_bits = 8
    x1 = jax.random.randint(k1, (2, 4, 16), 0, 2 ** num_bits, dtype=jnp.int32)
    out1 = jax.block_until_ready(binary_encode(x1, num_bits))
    ref1 = binary_encode_ref(x1, num_bits)
    assert out1.shape == (2, 4, 16, num_bits) and out1.dtype == jnp.float32
    assert jnp.array_equal(out1, ref1), "Pallas kernel mismatch vs reference (case 1)"

    # Case 2: non-lane-aligned flattened size, more bits, negative values.
    x2 = jax.random.randint(k2, (3, 50), -2048, 2048, dtype=jnp.int32)
    out2 = jax.block_until_ready(binary_encode(x2, 12))
    ref2 = binary_encode_ref(x2, 12)
    assert out2.shape == (3, 50, 12)
    assert jnp.array_equal(out2, ref2), "Pallas kernel mismatch vs reference (case 2)"

    # Case 3: bit-major fast path (no wrapper transpose) with bf16 output.
    out3 = jax.block_until_ready(
        binary_encode(x1, num_bits, dtype=jnp.bfloat16, bit_major=True))
    ref3 = jnp.moveaxis(binary_encode_ref(x1, num_bits, dtype=jnp.bfloat16), -1, 0)
    assert out3.shape == (num_bits, 2, 4, 16)
    assert jnp.array_equal(out3, ref3), "Pallas kernel mismatch vs reference (case 3)"

    # Case 4: int8 input DMA'd at native width, widened in-kernel.
    x4 = jax.random.randint(k2, (5, 33), -128, 128, dtype=jnp.int8)
    out4 = jax.block_until_ready(binary_encode(x4, 8))
    ref4 = ((x4.astype(jnp.int32)[..., None] >> jnp.arange(8)) & 1).astype(jnp.float32)
    assert jnp.array_equal(out4, ref4), "Pallas kernel mismatch vs reference (case 4)"

    print("KERNEL_OK")
</pallas_src>

<mosaic_0001>
module attributes {stable_mosaic.version = 11 : i64} {
  func.func @kernel(%arg0: i32, %arg1: memref<32x128xi32, #tpu.memory_space<vmem>>, %arg2: memref<8x32x128xf32, #tpu.memory_space<vmem>>) attributes {dimension_semantics = [#tpu.dimension_semantics<parallel>], iteration_bounds = array<i64: 1>, scalar_prefetch = 0 : i64, scratch_operands = 0 : i64, tpu.core_type = #tpu.core_type<tc>, window_params = [{transform_indices = @transform_0, window_bounds = array<i64: 32, 128>}, {transform_indices = @transform_1, window_bounds = array<i64: 8, 32, 128>}]} {
    %c0 = arith.constant 0 : index
    %c0_0 = arith.constant 0 : index
    %0 = vector.load %arg1[%c0, %c0_0] : memref<32x128xi32, #tpu.memory_space<vmem>>, vector<32x128xi32>
    %c0_i32 = arith.constant 0 : i32
    %1 = vector.broadcast %c0_i32 : i32 to vector<32x128xi32>
    %2 = arith.shrsi %0, %1 : vector<32x128xi32>
    %c1_i32 = arith.constant 1 : i32
    %3 = vector.broadcast %c1_i32 : i32 to vector<32x128xi32>
    %4 = arith.andi %2, %3 : vector<32x128xi32>
    %5 = arith.sitofp %4 : vector<32x128xi32> to vector<32x128xf32>
    %c0_1 = arith.constant 0 : index
    %c0_2 = arith.constant 0 : index
    %c0_3 = arith.constant 0 : index
    %6 = vector.load %arg2[%c0_1, %c0_2, %c0_3] : memref<8x32x128xf32, #tpu.memory_space<vmem>>, vector<1x32x128xf32>
    %7 = vector.shape_cast %6 : vector<1x32x128xf32> to vector<32x128xf32>
    %8 = vector.shape_cast %5 : vector<32x128xf32> to vector<1x32x128xf32>
    tpu.vector_store %arg2[%c0_1, %c0_2, %c0_3], %8 {strides = array<i32>} : memref<8x32x128xf32, #tpu.memory_space<vmem>>, vector<1x32x128xf32>,
    %c1_i32_4 = arith.constant 1 : i32
    %9 = vector.broadcast %c1_i32_4 : i32 to vector<32x128xi32>
    %10 = arith.shrsi %0, %9 : vector<32x128xi32>
    %c1_i32_5 = arith.constant 1 : i32
    %11 = vector.broadcast %c1_i32_5 : i32 to vector<32x128xi32>
    %12 = arith.andi %10, %11 : vector<32x128xi32>
    %13 = arith.sitofp %12 : vector<32x128xi32> to vector<32x128xf32>
    %c1 = arith.constant 1 : index
    %c0_6 = arith.constant 0 : index
    %c0_7 = arith.constant 0 : index
    %14 = vector.load %arg2[%c1, %c0_6, %c0_7] : memref<8x32x128xf32, #tpu.memory_space<vmem>>, vector<1x32x128xf32>
    %15 = vector.shape_cast %14 : vector<1x32x128xf32> to vector<32x128xf32>
    %16 = vector.shape_cast %13 : vector<32x128xf32> to vector<1x32x128xf32>
    tpu.vector_store %arg2[%c1, %c0_6, %c0_7], %16 {strides = array<i32>} : memref<8x32x128xf32, #tpu.memory_space<vmem>>, vector<1x32x128xf32>,
    %c2_i32 = arith.constant 2 : i32
    %17 = vector.broadcast %c2_i32 : i32 to vector<32x128xi32>
    %18 = arith.shrsi %0, %17 : vector<32x128xi32>
    %c1_i32_8 = arith.constant 1 : i32
    %19 = vector.broadcast %c1_i32_8 : i32 to vector<32x128xi32>
    %20 = arith.andi %18, %19 : vector<32x128xi32>
    %21 = arith.sitofp %20 : vector<32x128xi32> to vector<32x128xf32>
    %c2 = arith.constant 2 : index
    %c0_9 = arith.constant 0 : index
    %c0_10 = arith.constant 0 : index
    %22 = vector.load %arg2[%c2, %c0_9, %c0_10] : memref<8x32x128xf32, #tpu.memory_space<vmem>>, vector<1x32x128xf32>
    %23 = vector.shape_cast %22 : vector<1x32x128xf32> to vector<32x128xf32>
    %24 = vector.shape_cast %21 : vector<32x128xf32> to vector<1x32x128xf32>
    tpu.vector_store %arg2[%c2, %c0_9, %c0_10], %24 {strides = array<i32>} : memref<8x32x128xf32, #tpu.memory_space<vmem>>, vector<1x32x128xf32>,
    %c3_i32 = arith.constant 3 : i32
    %25 = vector.broadcast %c3_i32 : i32 to vector<32x128xi32>
    %26 = arith.shrsi %0, %25 : vector<32x128xi32>
    %c1_i32_11 = arith.constant 1 : i32
    %27 = vector.broadcast %c1_i32_11 : i32 to vector<32x128xi32>
    %28 = arith.andi %26, %27 : vector<32x128xi32>
    %29 = arith.sitofp %28 : vector<32x128xi32> to vector<32x128xf32>
    %c3 = arith.constant 3 : index
    %c0_12 = arith.constant 0 : index
    %c0_13 = arith.constant 0 : index
    %30 = vector.load %arg2[%c3, %c0_12, %c0_13] : memref<8x32x128xf32, #tpu.memory_space<vmem>>, vector<1x32x128xf32>
    %31 = vector.shape_cast %30 : vector<1x32x128xf32> to vector<32x128xf32>
    %32 = vector.shape_cast %29 : vector<32x128xf32> to vector<1x32x128xf32>
    tpu.vector_store %arg2[%c3, %c0_12, %c0_13], %32 {strides = array<i32>} : memref<8x32x128xf32, #tpu.memory_space<vmem>>, vector<1x32x128xf32>,
    %c4_i32 = arith.constant 4 : i32
    %33 = vector.broadcast %c4_i32 : i32 to vector<32x128xi32>
    %34 = arith.shrsi %0, %33 : vector<32x128xi32>
    %c1_i32_14 = arith.constant 1 : i32
    %35 = vector.broadcast %c1_i32_14 : i32 to vector<32x128xi32>
    %36 = arith.andi %34, %35 : vector<32x128xi32>
    %37 = arith.sitofp %36 : vector<32x128xi32> to vector<32x128xf32>
    %c4 = arith.constant 4 : index
    %c0_15 = arith.constant 0 : index
    %c0_16 = arith.constant 0 : index
    %38 = vector.load %arg2[%c4, %c0_15, %c0_16] : memref<8x32x128xf32, #tpu.memory_space<vmem>>, vector<1x32x128xf32>
    %39 = vector.shape_cast %38 : vector<1x32x128xf32> to vector<32x128xf32>
    %40 = vector.shape_cast %37 : vector<32x128xf32> to vector<1x32x128xf32>
    tpu.vector_store %arg2[%c4, %c0_15, %c0_16], %40 {strides = array<i32>} : memref<8x32x128xf32, #tpu.memory_space<vmem>>, vector<1x32x128xf32>,
    %c5_i32 = arith.constant 5 : i32
    %41 = vector.broadcast %c5_i32 : i32 to vector<32x128xi32>
    %42 = arith.shrsi %0, %41 : vector<32x128xi32>
    %c1_i32_17 = arith.constant 1 : i32
    %43 = vector.broadcast %c1_i32_17 : i32 to vector<32x128xi32>
    %44 = arith.andi %42, %43 : vector<32x128xi32>
    %45 = arith.sitofp %44 : vector<32x128xi32> to vector<32x128xf32>
    %c5 = arith.constant 5 : index
    %c0_18 = arith.constant 0 : index
    %c0_19 = arith.constant 0 : index
    %46 = vector.load %arg2[%c5, %c0_18, %c0_19] : memref<8x32x128xf32, #tpu.memory_space<vmem>>, vector<1x32x128xf32>
    %47 = vector.shape_cast %46 : vector<1x32x128xf32> to vector<32x128xf32>
    %48 = vector.shape_cast %45 : vector<32x128xf32> to vector<1x32x128xf32>
    tpu.vector_store %arg2[%c5, %c0_18, %c0_19], %48 {strides = array<i32>} : memref<8x32x128xf32, #tpu.memory_space<vmem>>, vector<1x32x128xf32>,
    %c6_i32 = arith.constant 6 : i32
    %49 = vector.broadcast %c6_i32 : i32 to vector<32x128xi32>
    %50 = arith.shrsi %0, %49 : vector<32x128xi32>
    %c1_i32_20 = arith.constant 1 : i32
    %51 = vector.broadcast %c1_i32_20 : i32 to vector<32x128xi32>
    %52 = arith.andi %50, %51 : vector<32x128xi32>
    %53 = arith.sitofp %52 : vector<32x128xi32> to vector<32x128xf32>
    %c6 = arith.constant 6 : index
    %c0_21 = arith.constant 0 : index
    %c0_22 = arith.constant 0 : index
    %54 = vector.load %arg2[%c6, %c0_21, %c0_22] : memref<8x32x128xf32, #tpu.memory_space<vmem>>, vector<1x32x128xf32>
    %55 = vector.shape_cast %54 : vector<1x32x128xf32> to vector<32x128xf32>
    %56 = vector.shape_cast %53 : vector<32x128xf32> to vector<1x32x128xf32>
    tpu.vector_store %arg2[%c6, %c0_21, %c0_22], %56 {strides = array<i32>} : memref<8x32x128xf32, #tpu.memory_space<vmem>>, vector<1x32x128xf32>,
    %c7_i32 = arith.constant 7 : i32
    %57 = vector.broadcast %c7_i32 : i32 to vector<32x128xi32>
    %58 = arith.shrsi %0, %57 : vector<32x128xi32>
    %c1_i32_23 = arith.constant 1 : i32
    %59 = vector.broadcast %c1_i32_23 : i32 to vector<32x128xi32>
    %60 = arith.andi %58, %59 : vector<32x128xi32>
    %61 = arith.sitofp %60 : vector<32x128xi32> to vector<32x128xf32>
    %c7 = arith.constant 7 : index
    %c0_24 = arith.constant 0 : index
    %c0_25 = arith.constant 0 : index
    %62 = vector.load %arg2[%c7, %c0_24, %c0_25] : memref<8x32x128xf32, #tpu.memory_space<vmem>>, vector<1x32x128xf32>
    %63 = vector.shape_cast %62 : vector<1x32x128xf32> to vector<32x128xf32>
    %64 = vector.shape_cast %61 : vector<32x128xf32> to vector<1x32x128xf32>
    tpu.vector_store %arg2[%c7, %c0_24, %c0_25], %64 {strides = array<i32>} : memref<8x32x128xf32, #tpu.memory_space<vmem>>, vector<1x32x128xf32>,
    return
  }
  func.func @transform_0(%arg0: i32) -> (i32, i32) {
    %c0_i32 = arith.constant 0 : i32
    %c0_i32_0 = arith.constant 0 : i32
    return %arg0, %c0_i32 : i32, i32
  }
  func.func @transform_1(%arg0: i32) -> (i32, i32, i32) {
    %c0_i32 = arith.constant 0 : i32
    %c0_i32_0 = arith.constant 0 : i32
    %c0_i32_1 = arith.constant 0 : i32
    return %c0_i32, %arg0, %c0_i32_0 : i32, i32, i32
  }
}

</mosaic_0001>

<llo_original>
// kernel: tpu_custom_call.1
$region0: #{tpu_custom_call.1}
  #allocation0 [shape = 'u32[]', space=smem, size = 0x4, offset = 0x4, fixed_abs, tag = 'smem constant byte address 0x4 - core index']
  #allocation1 [shape = 'u32[72,128]{1,0:T(1,128)}', space=vmem, size = 0x9000, scoped, tag = 'internal scratch']
  %s0 = inlined_call_operand.hbm [shape: s32[32,128], index: 0, kind: input, shape index: {}]
  %s1 = inlined_call_operand.hbm [shape: f32[8,32,128], index: 1, kind: output, shape index: {}]
  %s2 = sld [smem:[#allocation0]]
  $region18: #{tpu_custom_call.1} parent=0
    _
  %s4 = ssub.s32 1, %s2
  %s5 = scalar_select 0, %s4, %s2
  $region1: #{tpu_custom_call.1} parent=0
    #allocation2 [shape = 'u8[16384]{0}', space=vmem, size = 0x4000, scoped, tag = 'input window, operand 0, single buffered']
    #allocation3 [shape = 's32[1]{0}', space=sflag, size = 0x4, scoped, tag = 'scoped memory for tpu_custom_call.1']
    #allocation4 [shape = 's32[1]{0}', space=sflag, size = 0x4, scoped, tag = 'scoped memory for tpu_custom_call.1']
    #allocation5 [shape = 'u8[131072]{0}', space=vmem, size = 0x20000, scoped, tag = 'output window, operand 0, single buffered']
    %6 = vsyncpa [#allocation3], 0
    %7 = vsyncpa [#allocation4], 0
    // Predicated region
    $region2: #{tpu_custom_call.1} parent=1 // pred_check
      _
    $region3: #{tpu_custom_call.1} parent=1 // pred_check_branch
      %9 = sbr.rel (0) target = $region5
    $region4: #{tpu_custom_call.1} parent=1 // pred_region
      %11 = vsyncadd [#allocation3], 0
      %s12 = sshll.u32 %s0, 4
      %s13 = int_to_ptr.hbm [resolvable:$true] %s12
      %s14 = sshll.u32 [#allocation2], 4
      %s15 = int_to_ptr.vmem [resolvable:$true] %s14
      %20 = dma.hbm_to_vmem [thread:$0]  %s13, 512, %s15, [#allocation3], 128, 128, 8
    $region5: #{tpu_custom_call.1} parent=1 // pred_fallthru
      _
    // Predicated region
    $region6: #{tpu_custom_call.1} parent=1 // pred_check
      _
    $region7: #{tpu_custom_call.1} parent=1 // pred_check_branch
      %22 = sbr.rel (0) target = $region9
    $region8: #{tpu_custom_call.1} parent=1 // pred_region
      %24 = dma.done [#allocation3], 512
    $region9: #{tpu_custom_call.1} parent=1 // pred_fallthru
      _
    %v25 = vld [vmem:[#allocation2] sm:$0xff]
    %v26 = vld [vmem:[#allocation2 + $0x8] sm:$0xff]
    %v27 = vld [vmem:[#allocation2 + $0x10] sm:$0xff]
    %v28 = vld [vmem:[#allocation2 + $0x18] sm:$0xff]
    %v29 = vand.u32 %v25, 1
    %v30 = vand.u32 %v26, 1
    %v31 = vand.u32 %v27, 1
    %v32 = vand.u32 %v28, 1
    %v33 = vcvt.s32.f32 %v29
    %v34 = vcvt.s32.f32 %v30
    %v35 = vcvt.s32.f32 %v31
    %v36 = vcvt.s32.f32 %v32
    %37 = vst [vmem:[#allocation5] sm:$0xff] %v33
    %38 = vst [vmem:[#allocation5 + $0x8] sm:$0xff] %v34
    %39 = vst [vmem:[#allocation5 + $0x10] sm:$0xff] %v35
    %40 = vst [vmem:[#allocation5 + $0x18] sm:$0xff] %v36
    %v41 = vshra.s32 %v25, 1
    %v42 = vshra.s32 %v26, 1
    %v43 = vshra.s32 %v27, 1
    %v44 = vshra.s32 %v28, 1
    %v45 = vand.u32 %v41, 1
    %v46 = vand.u32 %v42, 1
    %v47 = vand.u32 %v43, 1
    %v48 = vand.u32 %v44, 1
    %v49 = vcvt.s32.f32 %v45
    %v50 = vcvt.s32.f32 %v46
    %v51 = vcvt.s32.f32 %v47
    %v52 = vcvt.s32.f32 %v48
    %s53 = scalar_lea.vmem [#allocation5], 32
    %54 = vst [vmem:[%s53] sm:$0xff] %v49
    %55 = vst [vmem:[%s53 + $0x8] sm:$0xff] %v50
    %56 = vst [vmem:[%s53 + $0x10] sm:$0xff] %v51
    %57 = vst [vmem:[%s53 + $0x18] sm:$0xff] %v52
    %v58 = vshra.s32 %v25, 2
    %v59 = vshra.s32 %v26, 2
    %v60 = vshra.s32 %v27, 2
    %v61 = vshra.s32 %v28, 2
    %v62 = vand.u32 %v58, 1
    %v63 = vand.u32 %v59, 1
    %v64 = vand.u32 %v60, 1
    %v65 = vand.u32 %v61, 1
    %v66 = vcvt.s32.f32 %v62
    %v67 = vcvt.s32.f32 %v63
    %v68 = vcvt.s32.f32 %v64
    %v69 = vcvt.s32.f32 %v65
    %s70 = scalar_lea.vmem [#allocation5], 64
    %71 = vst [vmem:[%s70] sm:$0xff] %v66
    %72 = vst [vmem:[%s70 + $0x8] sm:$0xff] %v67
    %73 = vst [vmem:[%s70 + $0x10] sm:$0xff] %v68
    %74 = vst [vmem:[%s70 + $0x18] sm:$0xff] %v69
    %v75 = vshra.s32 %v25, 3
    %v76 = vshra.s32 %v26, 3
    %v77 = vshra.s32 %v27, 3
    %v78 = vshra.s32 %v28, 3
    %v79 = vand.u32 %v75, 1
    %v80 = vand.u32 %v76, 1
    %v81 = vand.u32 %v77, 1
    %v82 = vand.u32 %v78, 1
    %v83 = vcvt.s32.f32 %v79
    %v84 = vcvt.s32.f32 %v80
    %v85 = vcvt.s32.f32 %v81
    %v86 = vcvt.s32.f32 %v82
    %s87 = scalar_lea.vmem [#allocation5], 96
    %88 = vst [vmem:[%s87] sm:$0xff] %v83
    %89 = vst [vmem:[%s87 + $0x8] sm:$0xff] %v84
    %90 = vst [vmem:[%s87 + $0x10] sm:$0xff] %v85
    %91 = vst [vmem:[%s87 + $0x18] sm:$0xff] %v86
    %v92 = vshra.s32 %v25, 4
    %v93 = vshra.s32 %v26, 4
    %v94 = vshra.s32 %v27, 4
    %v95 = vshra.s32 %v28, 4
    %v96 = vand.u32 %v92, 1
    %v97 = vand.u32 %v93, 1
    %v98 = vand.u32 %v94, 1
    %v99 = vand.u32 %v95, 1
    %v100 = vcvt.s32.f32 %v96
    %v101 = vcvt.s32.f32 %v97
    %v102 = vcvt.s32.f32 %v98
    %v103 = vcvt.s32.f32 %v99
    %s104 = scalar_lea.vmem [#allocation5], 128
    %105 = vst [vmem:[%s104] sm:$0xff] %v100
    %106 = vst [vmem:[%s104 + $0x8] sm:$0xff] %v101
    %107 = vst [vmem:[%s104 + $0x10] sm:$0xff] %v102
    %108 = vst [vmem:[%s104 + $0x18] sm:$0xff] %v103
    %v109 = vshra.s32 %v25, 5
    %v110 = vshra.s32 %v26, 5
    %v111 = vshra.s32 %v27, 5
    %v112 = vshra.s32 %v28, 5
    %v113 = vand.u32 %v109, 1
    %v114 = vand.u32 %v110, 1
    %v115 = vand.u32 %v111, 1
    %v116 = vand.u32 %v112, 1
    %v117 = vcvt.s32.f32 %v113
    %v118 = vcvt.s32.f32 %v114
    %v119 = vcvt.s32.f32 %v115
    %v120 = vcvt.s32.f32 %v116
    %s121 = scalar_lea.vmem [#allocation5], 160
    %122 = vst [vmem:[%s121] sm:$0xff] %v117
    %123 = vst [vmem:[%s121 + $0x8] sm:$0xff] %v118
    %124 = vst [vmem:[%s121 + $0x10] sm:$0xff] %v119
    %125 = vst [vmem:[%s121 + $0x18] sm:$0xff] %v120
    %v126 = vshra.s32 %v25, 6
    %v127 = vshra.s32 %v26, 6
    %v128 = vshra.s32 %v27, 6
    %v129 = vshra.s32 %v28, 6
    %v130 = vand.u32 %v126, 1
    %v131 = vand.u32 %v127, 1
    %v132 = vand.u32 %v128, 1
    %v133 = vand.u32 %v129, 1
    %v134 = vcvt.s32.f32 %v130
    %v135 = vcvt.s32.f32 %v131
    %v136 = vcvt.s32.f32 %v132
    %v137 = vcvt.s32.f32 %v133
    %s138 = scalar_lea.vmem [#allocation5], 192
    %139 = vst [vmem:[%s138] sm:$0xff] %v134
    %140 = vst [vmem:[%s138 + $0x8] sm:$0xff] %v135
    %141 = vst [vmem:[%s138 + $0x10] sm:$0xff] %v136
    %142 = vst [vmem:[%s138 + $0x18] sm:$0xff] %v137
    %v143 = vshra.s32 %v25, 7
    %v144 = vshra.s32 %v26, 7
    %v145 = vshra.s32 %v27, 7
    %v146 = vshra.s32 %v28, 7
    %v147 = vand.u32 %v143, 1
    %v148 = vand.u32 %v144, 1
    %v149 = vand.u32 %v145, 1
    %v150 = vand.u32 %v146, 1
    %v151 = vcvt.s32.f32 %v147
    %v152 = vcvt.s32.f32 %v148
    %v153 = vcvt.s32.f32 %v149
    %v154 = vcvt.s32.f32 %v150
    %s155 = scalar_lea.vmem [#allocation5], 224
    %156 = vst [vmem:[%s155] sm:$0xff] %v151
    %157 = vst [vmem:[%s155 + $0x8] sm:$0xff] %v152
    %158 = vst [vmem:[%s155 + $0x10] sm:$0xff] %v153
    %159 = vst [vmem:[%s155 + $0x18] sm:$0xff] %v154
    // Predicated region
    $region10: #{tpu_custom_call.1} parent=1 // pred_check
      _
    $region11: #{tpu_custom_call.1} parent=1 // pred_check_branch
      %161 = sbr.rel (0) target = $region13
    $region12: #{tpu_custom_call.1} parent=1 // pred_region
      %163 = vsyncadd [#allocation4], 0
      %s164 = sshll.u32 [#allocation5], 4
      %s165 = int_to_ptr.vmem [resolvable:$true] %s164
      %s166 = sshll.u32 %s1, 4
      %s167 = int_to_ptr.hbm [resolvable:$true] %s166
      %172 = dma.vmem_to_hbm [thread:$0]  %s165, 4096, %s167, [#allocation4], 128, 128, 8
    $region13: #{tpu_custom_call.1} parent=1 // pred_fallthru
      _
    // Predicated region
    $region14: #{tpu_custom_call.1} parent=1 // pred_check
      _
    $region15: #{tpu_custom_call.1} parent=1 // pred_check_branch
      %174 = sbr.rel (0) target = $region17
    $region16: #{tpu_custom_call.1} parent=1 // pred_region
      %176 = dma.done [#allocation4], 4096
    $region17: #{tpu_custom_call.1} parent=1 // pred_fallthru
      _
    %177 = vsyncpa [#allocation3], 1
    %178 = vsyncpa [#allocation4], 1

</llo_original>
